<compile_context>
chip_gen: v7x
topology: tpu7x:2x2x1
jax: 0.10.0
libtpu: 0.0.40
codegen_flags: <defaults>
</compile_context>

<pallas_src>
import functools
from typing import NamedTuple, Optional

import jax
import jax.numpy as jnp
from jax.experimental import pallas as pl
from jax.experimental.pallas import tpu as pltpu


def _round_up(x, m):
    return (x + m - 1) // m * m


def _pick_tile(dim_pad, max_tile, min_blocks=1):
    """Pick the largest lane-dense tile <= max_tile dividing dim_pad with
    at least `min_blocks` blocks. dim_pad is always a 128-multiple."""
    for t in (512, 256, 128):
        if t <= max_tile and dim_pad % t == 0 and dim_pad // t >= min_blocks:
            return t
    return 128  # dim_pad is a 128-multiple, so this always divides


# ----------------------------------------------------------------------------
# Kernels
# ----------------------------------------------------------------------------

def _equal_linear_kernel_fused(x_ref, w_ref, b_ref, o_ref, *, lr_mul):
    """2D grid, whole K resident in VMEM: single dot + fused epilogue."""
    # x_ref: (tm, K), w_ref: (K, tn), b_ref: (1, tn) f32
    acc = jnp.dot(x_ref[...], w_ref[...], preferred_element_type=jnp.float32)
    # y = (x @ W.T + b) * lr_mul  (lr_mul distributes over both terms)
    o_ref[...] = ((acc + b_ref[...]) * lr_mul).astype(o_ref.dtype)


def _equal_linear_kernel_ksplit(x_ref, w_ref, b_ref, o_ref, acc_ref, *, lr_mul):
    """3D grid with K innermost: f32 VMEM accumulator, init/finalize phases."""
    k = pl.program_id(2)

    @pl.when(k == 0)
    def _init():
        acc_ref[...] = jnp.zeros_like(acc_ref)

    acc_ref[...] += jnp.dot(x_ref[...], w_ref[...],
                            preferred_element_type=jnp.float32)

    @pl.when(k == pl.num_programs(2) - 1)
    def _finalize():
        o_ref[...] = ((acc_ref[...] + b_ref[...]) * lr_mul).astype(o_ref.dtype)


# ----------------------------------------------------------------------------
# One-time parameter preparation (hoist out of the hot path)
# ----------------------------------------------------------------------------

class EqualLinearParams(NamedTuple):
    w: jax.Array       # (K_pad, N_pad) in compute dtype (pre-transposed, padded)
    b: jax.Array       # (1, N_pad) float32 (padded)
    lr_mul: float
    in_dim: int
    out_dim: int
    K_pad: int
    N_pad: int
    tn: int
    tk: int
    split_k: bool


def prepare_equal_linear_params(weight, bias=None, *, lr_mul=1.0,
                                transfer_scale=None, transfer_shift=None,
                                compute_dtype=jnp.bfloat16,
                                split_k_threshold=4096):
    """Fold transfer_mode, cast, transpose and pad the weight ONCE.

    Do this outside the per-step hot path; equal_linear() then only pads the
    (small) activation per call.
    """
    out_dim, in_dim = weight.shape

    if transfer_scale is not None:
        # transfer_mode: weight = weight * scale + shift (elementwise, folded once)
        weight = weight * transfer_scale + transfer_shift
    if bias is None:
        bias = jnp.zeros((out_dim,), dtype=jnp.float32)

    K_pad = _round_up(in_dim, 128)
    N_pad = _round_up(out_dim, 128)

    # Drop the K grid axis whenever padded K fits easily in VMEM (typical
    # StyleGAN2 mapping layers: in_dim <= a few thousand).
    split_k = K_pad > split_k_threshold
    tk = _pick_tile(K_pad, 512) if split_k else K_pad
    # >=2 N-blocks whenever possible so a 1-row M grid still feeds both v7x TCs.
    tn = _pick_tile(N_pad, 512, min_blocks=2 if N_pad >= 256 else 1)

    if compute_dtype is None:
        compute_dtype = weight.dtype

    # Pre-transpose to (in_dim, out_dim) so the kernel contracts the natural
    # (tm,tk) x (tk,tn) layout -- no per-step weight-tile transpose on the XLU.
    wt = jnp.transpose(weight).astype(compute_dtype)
    if K_pad != in_dim or N_pad != out_dim:
        wt = jnp.pad(wt, ((0, K_pad - in_dim), (0, N_pad - out_dim)))

    b = bias.astype(jnp.float32)
    if N_pad != out_dim:
        b = jnp.pad(b, (0, N_pad - out_dim))
    b = b.reshape(1, N_pad)

    return EqualLinearParams(w=wt, b=b, lr_mul=float(lr_mul),
                             in_dim=in_dim, out_dim=out_dim,
                             K_pad=K_pad, N_pad=N_pad,
                             tn=tn, tk=tk, split_k=split_k)


# ----------------------------------------------------------------------------
# Forward
# ----------------------------------------------------------------------------

def equal_linear(x, params: EqualLinearParams, *, tm: Optional[int] = None):
    """y = x @ (weight * lr_mul).T + bias * lr_mul, using prepared params."""
    batch, in_dim = x.shape
    assert in_dim == params.in_dim, (in_dim, params.in_dim)

    compute_dtype = params.w.dtype
    in_bytes = jnp.dtype(compute_dtype).itemsize
    out_bytes = jnp.dtype(x.dtype).itemsize

    # Sub-32-bit dtypes pack along sublanes: bf16 vreg is [16,128] -> tm % 16.
    sub = 16 if in_bytes < 4 else 8
    if tm is None:
        tm = min(512, _round_up(batch, sub))
    else:
        tm = _round_up(tm, sub)
    M_pad = _round_up(batch, tm)

    xc = x.astype(compute_dtype)
    if M_pad != batch or params.K_pad != in_dim:
        xc = jnp.pad(xc, ((0, M_pad - batch), (0, params.K_pad - in_dim)))

    tn, tk, K_pad, N_pad = params.tn, params.tk, params.K_pad, params.N_pad

    # VMEM budget: double-buffered inputs + bias + double-buffered output
    # (+ f32 accumulator when K is split). Clamp to <=48 MiB so the plan stays
    # inside v7x's 64 MiB physical VMEM with headroom.
    need = (2 * (tm * tk + tk * tn) * in_bytes
            + 2 * tn * 4
            + 2 * tm * tn * out_bytes)
    if params.split_k:
        need += tm * tn * 4
    vmem_limit = int(min(48 * 1024 * 1024,
                         max(32 * 1024 * 1024, int(need * 1.5))))

    if not params.split_k:
        kernel = functools.partial(_equal_linear_kernel_fused,
                                   lr_mul=params.lr_mul)
        out = pl.pallas_call(
            kernel,
            out_shape=jax.ShapeDtypeStruct((M_pad, N_pad), x.dtype),
            grid_spec=pltpu.PrefetchScalarGridSpec(
                num_scalar_prefetch=0,
                grid=(M_pad // tm, N_pad // tn),
                in_specs=[
                    pl.BlockSpec((tm, K_pad), lambda i, j: (i, 0)),   # x
                    pl.BlockSpec((K_pad, tn), lambda i, j: (0, j)),   # weight
                    pl.BlockSpec((1, tn), lambda i, j: (0, j)),       # bias
                ],
                out_specs=pl.BlockSpec((tm, tn), lambda i, j: (i, j)),
            ),
            compiler_params=pltpu.CompilerParams(
                dimension_semantics=("parallel", "parallel"),
                vmem_limit_bytes=vmem_limit,
            ),
        )(xc, params.w, params.b)
    else:
        kernel = functools.partial(_equal_linear_kernel_ksplit,
                                   lr_mul=params.lr_mul)
        out = pl.pallas_call(
            kernel,
            out_shape=jax.ShapeDtypeStruct((M_pad, N_pad), x.dtype),
            grid_spec=pltpu.PrefetchScalarGridSpec(
                num_scalar_prefetch=0,
                grid=(M_pad // tm, N_pad // tn, K_pad // tk),
                in_specs=[
                    pl.BlockSpec((tm, tk), lambda i, j, k: (i, k)),   # x
                    pl.BlockSpec((tk, tn), lambda i, j, k: (k, j)),   # weight
                    pl.BlockSpec((1, tn), lambda i, j, k: (0, j)),    # bias
                ],
                out_specs=pl.BlockSpec((tm, tn), lambda i, j, k: (i, j)),
                scratch_shapes=[pltpu.VMEM((tm, tn), jnp.float32)],
            ),
            compiler_params=pltpu.CompilerParams(
                dimension_semantics=("parallel", "parallel", "arbitrary"),
                vmem_limit_bytes=vmem_limit,
            ),
        )(xc, params.w, params.b)

    if M_pad != batch or N_pad != params.out_dim:
        out = out[:batch, :params.out_dim]
    return out


def equal_linear_forward(x, weight, bias=None, lr_mul=1.0, *,
                         transfer_scale=None, transfer_shift=None,
                         compute_dtype=jnp.bfloat16):
    """One-shot convenience wrapper (prefer prepare + equal_linear in hot loops)."""
    params = prepare_equal_linear_params(
        weight, bias, lr_mul=lr_mul,
        transfer_scale=transfer_scale, transfer_shift=transfer_shift,
        compute_dtype=compute_dtype)
    return equal_linear(x, params)


# ----------------------------------------------------------------------------
# Demo / correctness check
# ----------------------------------------------------------------------------

if __name__ == "__main__":
    # Deterministic "module init": weight ~ N(0,1), bias = zeros (as in the
    # PyTorch EqualLinear.__init__). Small, lane-aligned shapes.
    in_dim, out_dim = 256, 256
    batch = 8
    lr_mul = 0.01  # typical StyleGAN2 mapping-network value

    key = jax.random.PRNGKey(0)
    k_x, k_w = jax.random.split(key)
    x = jax.random.normal(k_x, (batch, in_dim), dtype=jnp.float32)
    weight = jax.random.normal(k_w, (out_dim, in_dim), dtype=jnp.float32)
    bias = jnp.zeros((out_dim,), dtype=jnp.float32)

    # Reference with the same bf16-rounded operands (the kernel accumulates in
    # f32 and applies lr_mul in the epilogue, which distributes identically).
    xb = x.astype(jnp.bfloat16).astype(jnp.float32)
    wb = weight.astype(jnp.bfloat16).astype(jnp.float32)
    ref = (xb @ wb.T) * lr_mul + bias * lr_mul

    # 1) Fused single-shot path (whole K resident -> 2D parallel grid, no scratch).
    params = prepare_equal_linear_params(weight, bias, lr_mul=lr_mul)
    out = jax.block_until_ready(equal_linear(x, params))
    assert out.shape == (batch, out_dim)
    assert jnp.allclose(out, ref, atol=1e-4, rtol=1e-4), "fused path mismatch"

    # 2) K-split accumulator path (forced, to exercise the 3D grid + scratch).
    params_ks = prepare_equal_linear_params(weight, bias, lr_mul=lr_mul,
                                            split_k_threshold=128)
    out_ks = jax.block_until_ready(equal_linear(x, params_ks))
    assert jnp.allclose(out_ks, ref, atol=1e-4, rtol=1e-4), "K-split mismatch"

    # 3) transfer_mode: weight*scale + shift folded once at prepare time.
    k_s, k_t = jax.random.split(k_w)
    t_scale = 1.0 + 0.1 * jax.random.normal(k_s, (out_dim, in_dim), jnp.float32)
    t_shift = 0.1 * jax.random.normal(k_t, (out_dim, in_dim), jnp.float32)
    params_tr = prepare_equal_linear_params(weight, bias, lr_mul=lr_mul,
                                            transfer_scale=t_scale,
                                            transfer_shift=t_shift)
    out_tr = jax.block_until_ready(equal_linear(x, params_tr))
    wtb = (weight * t_scale + t_shift).astype(jnp.bfloat16).astype(jnp.float32)
    ref_tr = (xb @ wtb.T) * lr_mul + bias * lr_mul
    assert jnp.allclose(out_tr, ref_tr, atol=1e-4, rtol=1e-4), "transfer mismatch"

    print("KERNEL_OK")
</pallas_src>

<mosaic_0001>
module attributes {stable_mosaic.version = 11 : i64} {
  func.func @_equal_linear_kernel_fused(%arg0: i32, %arg1: i32, %arg2: memref<16x256xbf16, #tpu.memory_space<vmem>>, %arg3: memref<256x128xbf16, #tpu.memory_space<vmem>>, %arg4: memref<1x128xf32, #tpu.memory_space<vmem>>, %arg5: memref<16x128xf32, #tpu.memory_space<vmem>>) attributes {dimension_semantics = [#tpu.dimension_semantics<parallel>, #tpu.dimension_semantics<parallel>], iteration_bounds = array<i64: 1, 2>, scalar_prefetch = 0 : i64, scratch_operands = 0 : i64, tpu.core_type = #tpu.core_type<tc>, window_params = [{transform_indices = @transform_0, window_bounds = array<i64: 16, 256>}, {transform_indices = @transform_1, window_bounds = array<i64: 256, 128>}, {transform_indices = @transform_2, window_bounds = array<i64: 1, 128>}, {transform_indices = @transform_3, window_bounds = array<i64: 16, 128>}]} {
    %c0 = arith.constant 0 : index
    %c0_0 = arith.constant 0 : index
    %0 = vector.load %arg2[%c0, %c0_0] : memref<16x256xbf16, #tpu.memory_space<vmem>>, vector<16x256xbf16>
    %c0_1 = arith.constant 0 : index
    %c0_2 = arith.constant 0 : index
    %1 = vector.load %arg3[%c0_1, %c0_2] : memref<256x128xbf16, #tpu.memory_space<vmem>>, vector<256x128xbf16>
    %cst = arith.constant dense<0.000000e+00> : vector<16x128xf32>
    %2 = tpu.matmul %0, %1, %cst {dimension_numbers = #tpu.dot_dimension_numbers<[1], [0], [0], [1], [0, 0, 1, 1], [], []>} : vector<16x256xbf16>, vector<256x128xbf16>, vector<16x128xf32> -> vector<16x128xf32>
    %c0_3 = arith.constant 0 : index
    %c0_4 = arith.constant 0 : index
    %3 = vector.load %arg4[%c0_3, %c0_4] : memref<1x128xf32, #tpu.memory_space<vmem>>, vector<1x128xf32>
    %4 = vector.broadcast %3 : vector<1x128xf32> to vector<16x128xf32>
    %5 = arith.addf %2, %4 : vector<16x128xf32>
    %cst_5 = arith.constant 0.00999999977 : f32
    %6 = vector.broadcast %cst_5 : f32 to vector<16x128xf32>
    %7 = arith.mulf %5, %6 : vector<16x128xf32>
    %c0_6 = arith.constant 0 : index
    %c0_7 = arith.constant 0 : index
    %8 = vector.load %arg5[%c0_6, %c0_7] : memref<16x128xf32, #tpu.memory_space<vmem>>, vector<16x128xf32>
    tpu.vector_store %arg5[%c0_6, %c0_7], %7 {strides = array<i32>} : memref<16x128xf32, #tpu.memory_space<vmem>>, vector<16x128xf32>,
    return
  }
  func.func @transform_0(%arg0: i32, %arg1: i32) -> (i32, i32) {
    %c0_i32 = arith.constant 0 : i32
    %c0_i32_0 = arith.constant 0 : i32
    return %arg0, %c0_i32 : i32, i32
  }
  func.func @transform_1(%arg0: i32, %arg1: i32) -> (i32, i32) {
    %c0_i32 = arith.constant 0 : i32
    %c0_i32_0 = arith.constant 0 : i32
    return %c0_i32, %arg1 : i32, i32
  }
  func.func @transform_2(%arg0: i32, %arg1: i32) -> (i32, i32) {
    %c0_i32 = arith.constant 0 : i32
    %c0_i32_0 = arith.constant 0 : i32
    return %c0_i32, %arg1 : i32, i32
  }
  func.func @transform_3(%arg0: i32, %arg1: i32) -> (i32, i32) {
    %c0_i32 = arith.constant 0 : i32
    return %arg0, %arg1 : i32, i32
  }
}

</mosaic_0001>

<llo_original>
// kernel: tpu_custom_call.1
$region0: #{tpu_custom_call.1}
  #allocation0 [shape = 'u32[]', space=smem, size = 0x4, offset = 0x4, fixed_abs, tag = 'smem constant byte address 0x4 - core index']
  #allocation1 [shape = 'u32[144,128]{1,0:T(1,128)}', space=vmem, size = 0x12000, scoped, tag = 'internal scratch']
  %s0 = inlined_call_operand.hbm [shape: bf16[16,256], index: 0, kind: input, shape index: {}]
  %s1 = inlined_call_operand.hbm [shape: bf16[256,256], index: 1, kind: input, shape index: {}]
  %s2 = inlined_call_operand.vmem [shape: f32[1,256], index: 2, kind: input, shape index: {}]
  %s3 = inlined_call_operand.hbm [shape: f32[16,256], index: 3, kind: output, shape index: {}]
  %s4 = sld [smem:[#allocation0]]
  $region53: #{tpu_custom_call.1} parent=0
    _
  %s6 = ssub.s32 1, %s4
  %s7 = scalar_select 0, %s6, %s4
  $region1: #{tpu_custom_call.1} parent=0
    #allocation2 [shape = 'u8[8192]{0}', space=vmem, size = 0x2000, scoped, tag = 'input window, operand 0, single buffered']
    #allocation3 [shape = 's32[2]{0}', space=sflag, size = 0x8, scoped, tag = 'scoped memory for tpu_custom_call.1']
    #allocation4 [shape = 's32[2]{0}', space=sflag, size = 0x8, scoped, tag = 'scoped memory for tpu_custom_call.1']
    #allocation5 [shape = 'u8[131072]{0}', space=vmem, size = 0x20000, scoped, tag = 'input window, operand 1']
    #allocation6 [shape = 's32[2]{0}', space=sflag, size = 0x8, scoped, tag = 'scoped memory for tpu_custom_call.1']
    #allocation7 [shape = 'u8[16384]{0}', space=vmem, size = 0x4000, scoped, tag = 'output window, operand 0']
    %8 = vsyncpa [#allocation3], 0
    %9 = vsyncpa [#allocation6], 0
    %s10 = scalar_lea.sflag [#allocation6], 1
    %11 = vsyncpa %s10, 0
    %12 = vsyncpa [#allocation4], 0
    %s13 = scalar_lea.sflag [#allocation4], 1
    %14 = vsyncpa %s13, 0
    loop: start=0, step=1, limit=4
    $region2: #{tpu_custom_call.1} parent=1 // loop_pre_header
      _
    $region3: #{tpu_custom_call.1} parent=1 // loop_header
      %s16 = sphi 0, %s20
      %p17 = scmp.ge.s32.totalorder %s16, 4
      %s23 = sphi 0, %s35
      %s24 = sphi 0, %s31
      %s25 = sphi 0, %s23
      %s26 = sphi 0, %s24
      %s27 = sphi 0, %s25
      %s28 = sphi 0, %s26
      %s38 = sphi 0, %s40
      %s41 = sphi 0, %s38
      %s42 = sphi 0, %s41
      %s58 = sphi 0, %s42
      %s64 = sphi 0, %s66
      %s67 = sphi 0, %s64
      %s68 = sphi 0, %s67
      %s84 = sphi 0, %s68
      %s90 = sphi 0, %s92
      %s93 = sphi 0, %s90
      %s94 = sphi 0, %s93
      %s110 = sphi 0, %s94
      %s118 = sphi 0, %s120
      %s121 = sphi 0, %s118
      %s122 = sphi 0, %s121
      %s138 = sphi 0, %s122
    $region4: #{tpu_custom_call.1} parent=1 // loop_header_branch
      %19 = sbr.rel (%p17) target = $region8
    $region5: #{tpu_custom_call.1} parent=1 // loop_body
      %s21 = ssub.s32 %s16, 1
      %s22 = ssub.s32 %s16, 2
      %s29 = sadd.s32 1, %s24
      %p30 = scmp.ge.s32.totalorder %s29, 2
      %s31 = scalar_select %p30, 0, %s29
      %s32 = sadd.s32 1, %s23
      %s33 = scalar_select %p30, %s32, %s23
      %p34 = scmp.ge.s32.totalorder %s33, 1
      %s35 = scalar_select %p34, 0, %s33
      %s36 = ssub.s32 %s23, %s35
      %p37 = scmp.eq.s32.totalorder %s36, 0
      %s39 = sadd.s32 %s38, 1
      %s40 = scalar_select %p37, %s38, %s39
      %p43 = pneg %p37
      %p44 = scmp.eq.s32.totalorder %s16, 1
      %p45 = por %p43, %p44
      %p46 = scmp.ne.s32.totalorder %s38, %s41
      %p47 = scmp.eq.s32.totalorder %s16, 0
      %p48 = por %p46, %p47
      %p49 = scmp.ne.s32.totalorder %s38, %s41
      %p50 = scmp.eq.s32.totalorder %s21, 1
      %p51 = por %p49, %p50
      %p52 = scmp.ne.s32.totalorder %s41, %s42
      %p53 = scmp.eq.s32.totalorder %s21, 0
      %p54 = por %p52, %p53
      %p55 = scmp.ne.s32.totalorder %s41, %s42
      %p56 = scmp.eq.s32.totalorder %s22, 1
      %p57 = por %p55, %p56
      %p59 = scmp.ne.s32.totalorder %s42, %s58
      %p60 = scmp.eq.s32.totalorder %s22, 0
      %p61 = por %p59, %p60
      %s62 = ssub.s32 %s24, %s31
      %p63 = scmp.eq.s32.totalorder %s62, 0
      %s65 = sadd.s32 %s64, 1
      %s66 = scalar_select %p63, %s64, %s65
      %p69 = pneg %p63
      %p70 = scmp.eq.s32.totalorder %s16, 1
      %p71 = por %p69, %p70
      %p72 = scmp.ne.s32.totalorder %s64, %s67
      %p73 = scmp.eq.s32.totalorder %s16, 0
      %p74 = por %p72, %p73
      %p75 = scmp.ne.s32.totalorder %s64, %s67
      %p76 = scmp.eq.s32.totalorder %s21, 1
      %p77 = por %p75, %p76
      %p78 = scmp.ne.s32.totalorder %s67, %s68
      %p79 = scmp.eq.s32.totalorder %s21, 0
      %p80 = por %p78, %p79
      %p81 = scmp.ne.s32.totalorder %s67, %s68
      %p82 = scmp.eq.s32.totalorder %s22, 1
      %p83 = por %p81, %p82
      %p85 = scmp.ne.s32.totalorder %s68, %s84
      %p86 = scmp.eq.s32.totalorder %s22, 0
      %p87 = por %p85, %p86
      %s88 = ssub.s32 %s24, %s31
      %p89 = scmp.eq.s32.totalorder %s88, 0
      %s91 = sadd.s32 %s90, 1
      %s92 = scalar_select %p89, %s90, %s91
      %p95 = pneg %p89
      %p96 = scmp.eq.s32.totalorder %s16, 1
      %p97 = por %p95, %p96
      %p98 = scmp.ne.s32.totalorder %s90, %s93
      %p99 = scmp.eq.s32.totalorder %s16, 0
      %p100 = por %p98, %p99
      %p101 = scmp.ne.s32.totalorder %s90, %s93
      %p102 = scmp.eq.s32.totalorder %s21, 1
      %p103 = por %p101, %p102
      %p104 = scmp.ne.s32.totalorder %s93, %s94
      %p105 = scmp.eq.s32.totalorder %s21, 0
      %p106 = por %p104, %p105
      %p107 = scmp.ne.s32.totalorder %s93, %s94
      %p108 = scmp.eq.s32.totalorder %s22, 1
      %p109 = por %p107, %p108
      %p111 = scmp.ne.s32.totalorder %s94, %s110
      %p112 = scmp.eq.s32.totalorder %s22, 0
      %p113 = por %p111, %p112
      %s114 = ssub.s32 %s23, %s35
      %s115 = ssub.s32 %s24, %s31
      %s116 = sor.u32 %s114, %s115
      %p117 = scmp.eq.s32.totalorder %s116, 0
      %s119 = sadd.s32 %s118, 1
      %s120 = scalar_select %p117, %s118, %s119
      %p123 = pneg %p117
      %p124 = scmp.eq.s32.totalorder %s16, 1
      %p125 = por %p123, %p124
      %p126 = scmp.ne.s32.totalorder %s118, %s121
      %p127 = scmp.eq.s32.totalorder %s16, 0
      %p128 = por %p126, %p127
      %p129 = scmp.ne.s32.totalorder %s118, %s121
      %p130 = scmp.eq.s32.totalorder %s21, 1
      %p131 = por %p129, %p130
      %p132 = scmp.ne.s32.totalorder %s121, %s122
      %p133 = scmp.eq.s32.totalorder %s21, 0
      %p134 = por %p132, %p133
      %p135 = scmp.ne.s32.totalorder %s121, %s122
      %p136 = scmp.eq.s32.totalorder %s22, 1
      %p137 = por %p135, %p136
      %p139 = scmp.ne.s32.totalorder %s122, %s138
      %p140 = scmp.eq.s32.totalorder %s22, 0
      %p141 = por %p139, %p140
      %p142 = scmp.le.s32.totalorder 1, %s16
      %p143 = scmp.lt.s32.totalorder %s16, 3
      %p144 = pnand %p142, %p143
      %p145 = pneg %p144
      // Predicated region
      $region9: #{tpu_custom_call.1} parent=5 // pred_check
        _
      $region10: #{tpu_custom_call.1} parent=5 // pred_check_branch
        %147 = sbr.rel (%p144) target = $region12
      $region11: #{tpu_custom_call.1} parent=5 // pred_region
        %s148 = ssub.s32 %s16, 1
        // Predicated region
        $region13: #{tpu_custom_call.1} parent=11 // pred_check
          %p149 = pneg %p54
        $region14: #{tpu_custom_call.1} parent=11 // pred_check_branch
          %151 = sbr.rel (%p149) target = $region16
        $region15: #{tpu_custom_call.1} parent=11 // pred_region
          %s152 = smul.u32 2, %s25
          %s154 = ssub.s32 256, 256
          %155 = vsyncadd [#allocation3], %s154
          %s156 = smul.addr %s152, 2
          %s157 = smul.addr %s156, 64
          %s158 = scalar_lea.hbm %s0, %s157
          %s159 = sshll.u32 [#allocation2], 4
          %s160 = int_to_ptr.vmem [resolvable:$true] %s159
          %165 = dma.hbm_to_vmem [thread:$0]  %s158, 256, %s160, [#allocation3], 128, 128, 8
        $region16: #{tpu_custom_call.1} parent=11 // pred_fallthru
          _
      $region12: #{tpu_custom_call.1} parent=5 // pred_fallthru
        _
      %p166 = scmp.lt.s32.totalorder %s16, 2
      // Predicated region
      $region17: #{tpu_custom_call.1} parent=5 // pred_check
        %p167 = pneg %p166
      $region18: #{tpu_custom_call.1} parent=5 // pred_check_branch
        %169 = sbr.rel (%p167) target = $region20
      $region19: #{tpu_custom_call.1} parent=5 // pred_region
        // Predicated region
        $region21: #{tpu_custom_call.1} parent=19 // pred_check
          %p170 = pneg %p74
        $region22: #{tpu_custom_call.1} parent=19 // pred_check_branch
          %172 = sbr.rel (%p170) target = $region24
        $region23: #{tpu_custom_call.1} parent=19 // pred_region
          %s173 = sand.u32 %s64, 1
          %s174 = scalar_lea.sflag [#allocation6], %s173
          %s175 = sand.u32 %s64, 1
          %s176 = smul.addr %s175, 128
          %s177 = scalar_lea.vmem [#allocation5], %s176
          %s179 = ssub.s32 2048, 2048
          %180 = vsyncadd %s174, %s179
          %s181 = smul.addr %s24, 64
          %s182 = scalar_lea.hbm %s1, %s181
          %s183 = sshll.u32 %s177, 4
          %s184 = int_to_ptr.vmem [resolvable:$true] %s183
          %189 = dma.hbm_to_vmem [thread:$0]  %s182, 2048, %s184, %s174, 128, 64, 4
        $region24: #{tpu_custom_call.1} parent=19 // pred_fallthru
          _
        // Predicated region
        $region25: #{tpu_custom_call.1} parent=19 // pred_check
          %p190 = pneg %p100
        $region26: #{tpu_custom_call.1} parent=19 // pred_check_branch
          %192 = sbr.rel (%p190) target = $region28
        $region27: #{tpu_custom_call.1} parent=19 // pred_region
          %p193 = scmp.lt.s32.totalorder %s24, 1
          %s194 = scalar_select %p193, %s24, 1
          %s195 = scalar_lea.vmem %s2, %s194
        $region28: #{tpu_custom_call.1} parent=19 // pred_fallthru
          _
      $region20: #{tpu_custom_call.1} parent=5 // pred_fallthru
        _
      %p196 = scmp.le.s32.totalorder 1, %s16
      %p197 = scmp.lt.s32.totalorder %s16, 3
      %p198 = pnand %p196, %p197
      %p199 = pneg %p198
      // Predicated region
      $region29: #{tpu_custom_call.1} parent=5 // pred_check
        _
      $region30: #{tpu_custom_call.1} parent=5 // pred_check_branch
        %201 = sbr.rel (%p198) target = $region32
      $region31: #{tpu_custom_call.1} parent=5 // pred_region
        %s202 = ssub.s32 %s16, 1
        // Predicated region
        $region33: #{tpu_custom_call.1} parent=31 // pred_check
          %p203 = pneg %p54
        $region34: #{tpu_custom_call.1} parent=31 // pred_check_branch
          %205 = sbr.rel (%p203) target = $region36
        $region35: #{tpu_custom_call.1} parent=31 // pred_region
          %206 = dma.done [#allocation3], 256
        $region36: #{tpu_custom_call.1} parent=31 // pred_fallthru
          _
        %s207 = sand.u32 %s67, 1
        %s208 = scalar_lea.sflag [#allocation6], %s207
        %s209 = sand.u32 %s67, 1
        %s210 = smul.addr %s209, 128
        %s211 = scalar_lea.vmem [#allocation5], %s210
        // Predicated region
        $region37: #{tpu_custom_call.1} parent=31 // pred_check
          %p212 = pneg %p80
        $region38: #{tpu_custom_call.1} parent=31 // pred_check_branch
          %214 = sbr.rel (%p212) target = $region40
        $region39: #{tpu_custom_call.1} parent=31 // pred_region
          %215 = dma.done %s208, 2048
        $region40: #{tpu_custom_call.1} parent=31 // pred_fallthru
          _
        %p216 = pneg %p54
        %p217 = pneg %p51
        %s218 = sand.u32 %s67, 1
        %s219 = scalar_lea.sflag [#allocation6], %s218
        %s220 = sand.u32 %s67, 1
        %s221 = smul.addr %s220, 128
        %s222 = scalar_lea.vmem [#allocation5], %s221
        %p223 = pneg %p80
        %p224 = pneg %p77
        %p225 = scmp.lt.s32.totalorder %s26, 1
        %s226 = scalar_select %p225, %s26, 1
        %s227 = scalar_lea.vmem %s2, %s226
        %p228 = pneg %p106
        %p229 = pneg %p103
        %p230 = pneg %p134
        %p231 = pneg %p131
        %s232 = sand.u32 %s121, 1
        %s233 = scalar_lea.sflag [#allocation4], %s232
        %s234 = sand.u32 %s121, 1
        %s235 = smul.addr %s234, 16
        %s236 = scalar_lea.vmem [#allocation7], %s235
        %s237 = smul.u32 2, %s25
        %p238 = scmp.lt.s32.totalorder %s26, 1
        %s239 = scalar_select %p238, %s26, 1
        %s240 = scalar_lea.vmem %s2, %s239
        %s241 = smul.u32 2, %s25
        %v243 = vld [vmem:[#allocation2] sm:$0xff]
        %v244 = vld [vmem:[#allocation2 + $0x8] sm:$0xff]
        %v245 = vld [vmem:[%s211] sm:$0xf]
        %v246 = vld [vmem:[%s211 + $0x4] sm:$0xf]
        %v247 = vld [vmem:[%s211 + $0x8] sm:$0xf]
        %v248 = vld [vmem:[%s211 + $0xc] sm:$0xf]
        %v249 = vld [vmem:[%s211 + $0x10] sm:$0xf]
        %v250 = vld [vmem:[%s211 + $0x14] sm:$0xf]
        %v251 = vld [vmem:[%s211 + $0x18] sm:$0xf]
        %v252 = vld [vmem:[%s211 + $0x1c] sm:$0xf]
        %v253 = vld [vmem:[%s211 + $0x20] sm:$0xf]
        %v254 = vld [vmem:[%s211 + $0x24] sm:$0xf]
        %v255 = vld [vmem:[%s211 + $0x28] sm:$0xf]
        %v256 = vld [vmem:[%s211 + $0x2c] sm:$0xf]
        %v257 = vld [vmem:[%s211 + $0x30] sm:$0xf]
        %v258 = vld [vmem:[%s211 + $0x34] sm:$0xf]
        %v259 = vld [vmem:[%s211 + $0x38] sm:$0xf]
        %v260 = vld [vmem:[%s211 + $0x3c] sm:$0xf]
        %v261 = vld [vmem:[%s211 + $0x40] sm:$0xf]
        %v262 = vld [vmem:[%s211 + $0x44] sm:$0xf]
        %v263 = vld [vmem:[%s211 + $0x48] sm:$0xf]
        %v264 = vld [vmem:[%s211 + $0x4c] sm:$0xf]
        %v265 = vld [vmem:[%s211 + $0x50] sm:$0xf]
        %v266 = vld [vmem:[%s211 + $0x54] sm:$0xf]
        %v267 = vld [vmem:[%s211 + $0x58] sm:$0xf]
        %v268 = vld [vmem:[%s211 + $0x5c] sm:$0xf]
        %v269 = vld [vmem:[%s211 + $0x60] sm:$0xf]
        %v270 = vld [vmem:[%s211 + $0x64] sm:$0xf]
        %v271 = vld [vmem:[%s211 + $0x68] sm:$0xf]
        %v272 = vld [vmem:[%s211 + $0x6c] sm:$0xf]
        %v273 = vld [vmem:[%s211 + $0x70] sm:$0xf]
        %v274 = vld [vmem:[%s211 + $0x74] sm:$0xf]
        %v275 = vld [vmem:[%s211 + $0x78] sm:$0xf]
        %v276 = vld [vmem:[%s211 + $0x7c] sm:$0xf]
        %v277 = vld [vmem:[%s240] sm:$0x1]
        %v279 = vlaneseq
        %v280 = vshrl.u32 %v279, 7
        %v281 = vsub.s32 0, %v280
        %v282 = vrot.slane %v277, %v281
        %v286 = vunpack.c.l.b16 %v243
        %v287 = vunpack.c.h.b16 %v243
        %v288 = vunpack.c.l.b16 %v244
        %v289 = vunpack.c.h.b16 %v244
        %v290 = vpack.c.b16 %v288, %v286
        %v291 = vpack.c.b16 %v289, %v287
        %v326 = vunpack.c.l.b16 %v245
        %v327 = vunpack.c.l.b16 %v246
        %v328 = vunpack.c.l.b16 %v247
        %v329 = vunpack.c.l.b16 %v248
        %v330 = vunpack.c.l.b16 %v249
        %v331 = vunpack.c.l.b16 %v250
        %v332 = vunpack.c.l.b16 %v251
        %v333 = vunpack.c.l.b16 %v252
        %v334 = vunpack.c.l.b16 %v253
        %v335 = vunpack.c.l.b16 %v254
        %v336 = vunpack.c.l.b16 %v255
        %v337 = vunpack.c.l.b16 %v256
        %v338 = vunpack.c.l.b16 %v257
        %v339 = vunpack.c.l.b16 %v258
        %v340 = vunpack.c.l.b16 %v259
        %v341 = vunpack.c.l.b16 %v260
        %v342 = vunpack.c.l.b16 %v261
        %v343 = vunpack.c.l.b16 %v262
        %v344 = vunpack.c.l.b16 %v263
        %v345 = vunpack.c.l.b16 %v264
        %v346 = vunpack.c.l.b16 %v265
        %v347 = vunpack.c.l.b16 %v266
        %v348 = vunpack.c.l.b16 %v267
        %v349 = vunpack.c.l.b16 %v268
        %v350 = vunpack.c.l.b16 %v269
        %v351 = vunpack.c.l.b16 %v270
        %v352 = vunpack.c.l.b16 %v271
        %v353 = vunpack.c.l.b16 %v272
        %v354 = vunpack.c.l.b16 %v273
        %v355 = vunpack.c.l.b16 %v274
        %v356 = vunpack.c.l.b16 %v275
        %v357 = vunpack.c.l.b16 %v276
        %v358 = vpack.c.b16 %v327, %v326
        %v359 = vpack.c.b16 %v329, %v328
        %v360 = vpack.c.b16 %v331, %v330
        %v361 = vpack.c.b16 %v333, %v332
        %v362 = vpack.c.b16 %v335, %v334
        %v363 = vpack.c.b16 %v337, %v336
        %v364 = vpack.c.b16 %v339, %v338
        %v365 = vpack.c.b16 %v341, %v340
        %v366 = vpack.c.b16 %v343, %v342
        %v367 = vpack.c.b16 %v345, %v344
        %v368 = vpack.c.b16 %v347, %v346
        %v369 = vpack.c.b16 %v349, %v348
        %v370 = vpack.c.b16 %v351, %v350
        %v371 = vpack.c.b16 %v353, %v352
        %v372 = vpack.c.b16 %v355, %v354
        %v373 = vpack.c.b16 %v357, %v356
        %390 = vmatprep.subr.bf16.mxu0 0
        %391 = vmatpush1.bf16.msra.mxu0 %v358
        %392 = vmatprep.subr.bf16.mxu0 0
        %393 = vmatpush1.bf16.msra.mxu0 %v359
        %394 = vmatprep.subr.bf16.mxu0 0
        %395 = vmatpush1.bf16.msra.mxu0 %v360
        %396 = vmatprep.subr.bf16.mxu0 0
        %397 = vmatpush1.bf16.msra.mxu0 %v361
        %398 = vmatprep.subr.bf16.mxu0 0
        %399 = vmatpush1.bf16.msra.mxu0 %v362
        %400 = vmatprep.subr.bf16.mxu0 0
        %401 = vmatpush1.bf16.msra.mxu0 %v363
        %402 = vmatprep.subr.bf16.mxu0 0
        %403 = vmatpush1.bf16.msra.mxu0 %v364
        %404 = vmatprep.subr.bf16.mxu0 0
        %405 = vmatpush1.bf16.msra.mxu0 %v365
        %406 = vmatprep.subr.bf16.mxu0 0
        %407 = vmatpush1.bf16.msra.mxu0 %v366
        %408 = vmatprep.subr.bf16.mxu0 0
        %409 = vmatpush1.bf16.msra.mxu0 %v367
        %410 = vmatprep.subr.bf16.mxu0 0
        %411 = vmatpush1.bf16.msra.mxu0 %v368
        %412 = vmatprep.subr.bf16.mxu0 0
        %413 = vmatpush1.bf16.msra.mxu0 %v369
        %414 = vmatprep.subr.bf16.mxu0 0
        %415 = vmatpush1.bf16.msra.mxu0 %v370
        %416 = vmatprep.subr.bf16.mxu0 0
        %417 = vmatpush1.bf16.msra.mxu0 %v371
        %418 = vmatprep.subr.bf16.mxu0 0
        %419 = vmatpush1.bf16.msra.mxu0 %v372
        %420 = vmatprep.subr.bf16.mxu0 0
        %421 = vmatpush1.bf16.msra.mxu0 %v373
        %422 = vmatprep.mubr.bf16.mxu0 %v291
        %423 = vmatmul.mubr.bf16.gmra.mrb[0].mxu0 %v290
        %v424 = vpop.f32.mrb[0].mxu0
        %v425 = vadd.f32 %v282, %v424
        %v426 = vpop.f32.mrb[0].mxu0
        %v427 = vpop.f32.mrb[0].mxu0
        %v428 = vadd.f32 %v282, %v427
        %v429 = vpop.f32.mrb[0].mxu0
        %430 = vdwg.mxu0
        %v431 = vmul.f32 %v425, 0.01
        %v432 = vmul.f32 %v428, 0.01
        %433 = vst [vmem:[%s236] sm:$0xff] %v431
        %434 = vst [vmem:[%s236 + $0x8] sm:$0xff] %v432
        %s435 = sand.u32 %s121, 1
        %s436 = scalar_lea.sflag [#allocation4], %s435
        %s437 = sand.u32 %s121, 1
        %s438 = smul.addr %s437, 16
        %s439 = scalar_lea.vmem [#allocation7], %s438
        // Predicated region
        $region41: #{tpu_custom_call.1} parent=31 // pred_check
          %p440 = pneg %p131
        $region42: #{tpu_custom_call.1} parent=31 // pred_check_branch
          %442 = sbr.rel (%p440) target = $region44
        $region43: #{tpu_custom_call.1} parent=31 // pred_region
          %s443 = smul.u32 2, %s25
          %s445 = ssub.s32 256, 256
          %446 = vsyncadd %s436, %s445
          %s447 = smul.addr %s443, 2
          %s448 = sadd.s32 %s26, %s447
          %s449 = smul.addr %s448, 128
          %s450 = scalar_lea.hbm %s3, %s449
          %s451 = sshll.u32 %s439, 4
          %s452 = int_to_ptr.vmem [resolvable:$true] %s451
          %457 = dma.vmem_to_hbm [thread:$0]  %s452, 256, %s450, %s436, 128, 256, 8
        $region44: #{tpu_custom_call.1} parent=31 // pred_fallthru
          _
      $region32: #{tpu_custom_call.1} parent=5 // pred_fallthru
        _
      %p458 = scmp.le.s32.totalorder 2, %s16
      // Predicated region
      $region45: #{tpu_custom_call.1} parent=5 // pred_check
        %p459 = pneg %p458
      $region46: #{tpu_custom_call.1} parent=5 // pred_check_branch
        %461 = sbr.rel (%p459) target = $region48
      $region47: #{tpu_custom_call.1} parent=5 // pred_region
        %s462 = ssub.s32 %s16, 2
        // Predicated region
        $region49: #{tpu_custom_call.1} parent=47 // pred_check
          %p463 = pneg %p137
        $region50: #{tpu_custom_call.1} parent=47 // pred_check_branch
          %465 = sbr.rel (%p463) target = $region52
        $region51: #{tpu_custom_call.1} parent=47 // pred_region
          %s466 = sand.u32 %s122, 1
          %s467 = scalar_lea.sflag [#allocation4], %s466
          %s468 = sand.u32 %s122, 1
          %s469 = smul.addr %s468, 16
          %s470 = scalar_lea.vmem [#allocation7], %s469
          %471 = dma.done %s467, 256
        $region52: #{tpu_custom_call.1} parent=47 // pred_fallthru
          _
      $region48: #{tpu_custom_call.1} parent=5 // pred_fallthru
        _
    $region6: #{tpu_custom_call.1} parent=1 // loop_footer
      %s20 = sadd.s32 1, %s16
    $region7: #{tpu_custom_call.1} parent=1 // loop_footer_branch
      %15 = sbr.rel target = $region3
    $region8: #{tpu_custom_call.1} parent=1 // loop_exit
      _
    %472 = vsyncpa [#allocation3], 1
    %s473 = scalar_lea.sflag [#allocation3], 1
    %474 = vsyncpa %s473, 1
    %475 = vsyncpa [#allocation6], 1
    %s476 = scalar_lea.sflag [#allocation6], 1
    %477 = vsyncpa %s476, 1
    %478 = vsyncpa [#allocation4], 1
    %s479 = scalar_lea.sflag [#allocation4], 1
    %480 = vsyncpa %s479, 1

</llo_original>
